<compile_context>
chip_gen: v7x
topology: tpu7x:2x2x1
jax: 0.10.0
libtpu: 0.0.40
codegen_flags: <defaults>
</compile_context>

<pallas_src>
import functools
import math

import jax
import jax.numpy as jnp
import numpy as np
from jax.experimental import pallas as pl
from jax.experimental.pallas import tpu as pltpu


def _round_up(x: int, m: int) -> int:
    return ((x + m - 1) // m) * m


def _euclid_loss_kernel(us_ref, vs_ref, y_ref, out_ref, *,
                        beta, R, inv_sigma_sq, const_term, inv_nm1,
                        calc_latent):
    # Upcast immediately (keeps v5e happy if bf16 inputs are ever fed in).
    u = us_ref[...].astype(jnp.float32)      # (D, tB)  D on sublanes, pairs on lanes
    v = vs_ref[...].astype(jnp.float32)      # (D, tB)
    y = y_ref[...].astype(jnp.float32)       # (1, tB)

    diff = u - v
    sq_dist = jnp.sum(diff * diff, axis=0, keepdims=True)     # (1, tB) sublane reduce
    dist = jnp.sqrt(sq_dist)

    # t = beta * (dist - R); loss_y = y*softplus(t) + (1-y)*softplus(-t)
    #                                = softplus(t) - (1-y)*t
    t = beta * (dist - R)
    sp = jnp.maximum(t, 0.0) + jnp.log1p(jnp.exp(-jnp.abs(t)))  # stable softplus
    loss = sp - (1.0 - y) * t

    if calc_latent:
        uu = jnp.sum(u * u, axis=0, keepdims=True)             # (1, tB)
        vv = jnp.sum(v * v, axis=0, keepdims=True)             # (1, tB)
        latent = 2.0 * const_term + 0.5 * inv_sigma_sq * (uu + vv)
        loss = loss + latent * inv_nm1

    out_ref[...] = loss                                        # lane-dense store


def euclidean_forward(table, pairs, labels, *, n_nodes, R, beta=1.0,
                      sigma=1.0, calc_latent=True, tile_b=1024):
    """Forward pass of the Euclidean latent-space model.

    table : (n_nodes, D) float embedding table
    pairs : (B, 2) int32 node indices
    labels: (B,) {0,1} labels
    returns: (B,) float32 per-pair loss
    """
    # --- glue: gather embedding rows (kept in JAX; see TODO(synk) above) ---
    us = jnp.take(table, pairs[:, 0], axis=0)     # (B, D)
    vs = jnp.take(table, pairs[:, 1], axis=0)     # (B, D)
    B, D = us.shape

    # Transpose so the pair axis sits on lanes (D is small, B is big).
    us_t = us.T.astype(jnp.float32)               # (D, B)
    vs_t = vs.T.astype(jnp.float32)               # (D, B)
    y = labels.astype(jnp.float32).reshape(1, B)  # (1, B)

    # Pick the biggest lane tile that makes sense and pad B up to it.
    tB = min(int(tile_b), _round_up(B, 128))
    Bp = _round_up(B, tB)
    pad = Bp - B
    if pad:
        us_t = jnp.pad(us_t, ((0, 0), (0, pad)))
        vs_t = jnp.pad(vs_t, ((0, 0), (0, pad)))
        y = jnp.pad(y, ((0, 0), (0, pad)))

    # Compile-time scalar constants (computed with the TRUE embedding dim D).
    sigma_sq = float(sigma) ** 2
    const_term = 0.5 * D * math.log(2.0 * math.pi * sigma_sq)
    inv_sigma_sq = 1.0 / sigma_sq
    inv_nm1 = 1.0 / float(n_nodes - 1)

    kernel = functools.partial(
        _euclid_loss_kernel,
        beta=float(beta), R=float(R),
        inv_sigma_sq=inv_sigma_sq, const_term=const_term,
        inv_nm1=inv_nm1, calc_latent=bool(calc_latent))

    grid = (Bp // tB,)

    cost = pl.CostEstimate(
        flops=int(Bp * (3 * D + 15)),
        transcendentals=int(3 * Bp),                       # exp + log1p + sqrt
        bytes_accessed=int(2 * Bp * D * 4 + Bp * 4 + Bp * 4))

    out = pl.pallas_call(
        kernel,
        out_shape=jax.ShapeDtypeStruct((1, Bp), jnp.float32),
        grid=grid,
        in_specs=[
            pl.BlockSpec((D, tB), lambda i: (0, i)),       # us (pairs on lanes)
            pl.BlockSpec((D, tB), lambda i: (0, i)),       # vs
            pl.BlockSpec((1, tB), lambda i: (0, i)),       # labels
        ],
        out_specs=pl.BlockSpec((1, tB), lambda i: (0, i)), # lane-dense loss
        compiler_params=pltpu.CompilerParams(
            dimension_semantics=("parallel",),
            vmem_limit_bytes=32 * 1024 * 1024),
        cost_estimate=cost,
    )(us_t, vs_t, y)

    return out[0, :B]


def _reference_forward(table, pairs, labels, *, n_nodes, R, beta, sigma,
                       calc_latent):
    """Pure-JAX reference with identical semantics (for a sanity check)."""
    us = jnp.take(table, pairs[:, 0], axis=0).astype(jnp.float32)
    vs = jnp.take(table, pairs[:, 1], axis=0).astype(jnp.float32)
    y = labels.astype(jnp.float32)
    D = us.shape[1]
    dist = jnp.sqrt(jnp.sum((us - vs) ** 2, axis=1))
    t = beta * (dist - R)
    sp = jnp.maximum(t, 0.0) + jnp.log1p(jnp.exp(-jnp.abs(t)))
    loss = sp - (1.0 - y) * t
    if calc_latent:
        sigma_sq = sigma ** 2
        c = 0.5 * D * math.log(2.0 * math.pi * sigma_sq)
        lik_u = c + 0.5 * jnp.sum(us * us, axis=1) / sigma_sq
        lik_v = c + 0.5 * jnp.sum(vs * vs, axis=1) / sigma_sq
        loss = loss + (lik_u + lik_v) / (n_nodes - 1)
    return loss


if __name__ == "__main__":
    # Small deterministic example consistent with the module:
    #   n_nodes=32 node embedding table, n_dim=8, B=64 sampled pairs.
    n_nodes, n_dim, B = 32, 8, 64
    R, beta, sigma, init_range = 1.0, 1.5, 1.0, 0.01

    key = jax.random.PRNGKey(0)
    k_tab, k_pairs, k_lab = jax.random.split(key, 3)

    table = init_range * jax.random.normal(k_tab, (n_nodes, n_dim), jnp.float32)
    pairs = jax.random.randint(k_pairs, (B, 2), 0, n_nodes, dtype=jnp.int32)
    labels = jax.random.bernoulli(k_lab, 0.5, (B,)).astype(jnp.float32)

    loss = euclidean_forward(table, pairs, labels, n_nodes=n_nodes, R=R,
                             beta=beta, sigma=sigma, calc_latent=True)
    loss = jax.block_until_ready(loss)

    ref = _reference_forward(table, pairs, labels, n_nodes=n_nodes, R=R,
                             beta=beta, sigma=sigma, calc_latent=True)
    np.testing.assert_allclose(np.asarray(loss), np.asarray(ref),
                               rtol=1e-5, atol=1e-5)

    print("KERNEL_OK")
</pallas_src>

<mosaic_0001>
module attributes {stable_mosaic.version = 11 : i64} {
  func.func @_euclid_loss_kernel(%arg0: i32, %arg1: memref<8x128xf32, #tpu.memory_space<vmem>>, %arg2: memref<8x128xf32, #tpu.memory_space<vmem>>, %arg3: memref<1x128xf32, #tpu.memory_space<vmem>>, %arg4: memref<1x128xf32, #tpu.memory_space<vmem>>) attributes {dimension_semantics = [#tpu.dimension_semantics<parallel>], iteration_bounds = array<i64: 1>, scalar_prefetch = 0 : i64, scratch_operands = 0 : i64, tpu.core_type = #tpu.core_type<tc>, window_params = [{transform_indices = @transform_0, window_bounds = array<i64: 8, 128>}, {transform_indices = @transform_1, window_bounds = array<i64: 8, 128>}, {transform_indices = @transform_2, window_bounds = array<i64: 1, 128>}, {transform_indices = @transform_3, window_bounds = array<i64: 1, 128>}]} {
    %c0 = arith.constant 0 : index
    %c0_0 = arith.constant 0 : index
    %0 = vector.load %arg1[%c0, %c0_0] : memref<8x128xf32, #tpu.memory_space<vmem>>, vector<8x128xf32>
    %c0_1 = arith.constant 0 : index
    %c0_2 = arith.constant 0 : index
    %1 = vector.load %arg2[%c0_1, %c0_2] : memref<8x128xf32, #tpu.memory_space<vmem>>, vector<8x128xf32>
    %c0_3 = arith.constant 0 : index
    %c0_4 = arith.constant 0 : index
    %2 = vector.load %arg3[%c0_3, %c0_4] : memref<1x128xf32, #tpu.memory_space<vmem>>, vector<1x128xf32>
    %3 = arith.subf %0, %1 : vector<8x128xf32>
    %4 = arith.mulf %3, %3 : vector<8x128xf32>
    %cst = arith.constant dense<0.000000e+00> : vector<128xf32>
    %5 = vector.multi_reduction <add>, %4, %cst [0] : vector<8x128xf32> to vector<128xf32>
    %6 = vector.shape_cast %5 : vector<128xf32> to vector<1x128xf32>
    %7 = math.sqrt %6 : vector<1x128xf32>
    %cst_5 = arith.constant 1.000000e+00 : f32
    %8 = vector.broadcast %cst_5 : f32 to vector<1x128xf32>
    %9 = arith.subf %7, %8 : vector<1x128xf32>
    %cst_6 = arith.constant 1.500000e+00 : f32
    %10 = vector.broadcast %cst_6 : f32 to vector<1x128xf32>
    %11 = arith.mulf %10, %9 : vector<1x128xf32>
    %cst_7 = arith.constant 0.000000e+00 : f32
    %12 = vector.broadcast %cst_7 : f32 to vector<1x128xf32>
    %13 = arith.maximumf %11, %12 : vector<1x128xf32>
    %14 = math.absf %11 : vector<1x128xf32>
    %cst_8 = arith.constant 0.000000e+00 : f32
    %15 = vector.broadcast %cst_8 : f32 to vector<1x128xf32>
    %16 = arith.subf %15, %14 : vector<1x128xf32>
    %17 = math.exp %16 : vector<1x128xf32>
    %18 = math.log1p %17 : vector<1x128xf32>
    %19 = arith.addf %13, %18 : vector<1x128xf32>
    %cst_9 = arith.constant 1.000000e+00 : f32
    %20 = vector.broadcast %cst_9 : f32 to vector<1x128xf32>
    %21 = arith.subf %20, %2 : vector<1x128xf32>
    %22 = arith.mulf %21, %11 : vector<1x128xf32>
    %23 = arith.subf %19, %22 : vector<1x128xf32>
    %24 = arith.mulf %0, %0 : vector<8x128xf32>
    %cst_10 = arith.constant dense<0.000000e+00> : vector<128xf32>
    %25 = vector.multi_reduction <add>, %24, %cst_10 [0] : vector<8x128xf32> to vector<128xf32>
    %26 = vector.shape_cast %25 : vector<128xf32> to vector<1x128xf32>
    %27 = arith.mulf %1, %1 : vector<8x128xf32>
    %cst_11 = arith.constant dense<0.000000e+00> : vector<128xf32>
    %28 = vector.multi_reduction <add>, %27, %cst_11 [0] : vector<8x128xf32> to vector<128xf32>
    %29 = vector.shape_cast %28 : vector<128xf32> to vector<1x128xf32>
    %30 = arith.addf %26, %29 : vector<1x128xf32>
    %cst_12 = arith.constant 5.000000e-01 : f32
    %31 = vector.broadcast %cst_12 : f32 to vector<1x128xf32>
    %32 = arith.mulf %31, %30 : vector<1x128xf32>
    %cst_13 = arith.constant 14.7030163 : f32
    %33 = vector.broadcast %cst_13 : f32 to vector<1x128xf32>
    %34 = arith.addf %33, %32 : vector<1x128xf32>
    %cst_14 = arith.constant 0.0322580636 : f32
    %35 = vector.broadcast %cst_14 : f32 to vector<1x128xf32>
    %36 = arith.mulf %34, %35 : vector<1x128xf32>
    %37 = arith.addf %23, %36 : vector<1x128xf32>
    %c0_15 = arith.constant 0 : index
    %c0_16 = arith.constant 0 : index
    %38 = vector.load %arg4[%c0_15, %c0_16] : memref<1x128xf32, #tpu.memory_space<vmem>>, vector<1x128xf32>
    tpu.vector_store %arg4[%c0_15, %c0_16], %37 {strides = array<i32>} : memref<1x128xf32, #tpu.memory_space<vmem>>, vector<1x128xf32>,
    return
  }
  func.func @transform_0(%arg0: i32) -> (i32, i32) {
    %c0_i32 = arith.constant 0 : i32
    %c0_i32_0 = arith.constant 0 : i32
    return %c0_i32, %arg0 : i32, i32
  }
  func.func @transform_1(%arg0: i32) -> (i32, i32) {
    %c0_i32 = arith.constant 0 : i32
    %c0_i32_0 = arith.constant 0 : i32
    return %c0_i32, %arg0 : i32, i32
  }
  func.func @transform_2(%arg0: i32) -> (i32, i32) {
    %c0_i32 = arith.constant 0 : i32
    %c0_i32_0 = arith.constant 0 : i32
    return %c0_i32, %arg0 : i32, i32
  }
  func.func @transform_3(%arg0: i32) -> (i32, i32) {
    %c0_i32 = arith.constant 0 : i32
    %c0_i32_0 = arith.constant 0 : i32
    return %c0_i32, %arg0 : i32, i32
  }
}

</mosaic_0001>

<llo_original>
// kernel: tpu_custom_call.1
$region0: #{tpu_custom_call.1}
  #allocation0 [shape = 'u32[]', space=smem, size = 0x4, offset = 0x4, fixed_abs, tag = 'smem constant byte address 0x4 - core index']
  #allocation1 [shape = 'u32[144,128]{1,0:T(1,128)}', space=vmem, size = 0x12000, scoped, tag = 'internal scratch']
  %s0 = inlined_call_operand.hbm [shape: f32[8,128], index: 0, kind: input, shape index: {}]
  %s1 = inlined_call_operand.hbm [shape: f32[8,128], index: 1, kind: input, shape index: {}]
  %s2 = inlined_call_operand.vmem [shape: f32[1,128], index: 2, kind: input, shape index: {}]
  %s3 = inlined_call_operand.hbm [shape: f32[1,128], index: 3, kind: output, shape index: {}]
  %s4 = sld [smem:[#allocation0]]
  $region30: #{tpu_custom_call.1} parent=0
    _
  %s6 = ssub.s32 1, %s4
  %s7 = scalar_select 0, %s6, %s4
  $region1: #{tpu_custom_call.1} parent=0
    #allocation2 [shape = 'u8[4096]{0}', space=vmem, size = 0x1000, scoped, tag = 'input window, operand 0, single buffered']
    #allocation3 [shape = 's32[1]{0}', space=sflag, size = 0x4, scoped, tag = 'scoped memory for tpu_custom_call.1']
    #allocation4 [shape = 's32[1]{0}', space=sflag, size = 0x4, scoped, tag = 'scoped memory for tpu_custom_call.1']
    #allocation5 [shape = 'u8[4096]{0}', space=vmem, size = 0x1000, scoped, tag = 'input window, operand 1, single buffered']
    #allocation6 [shape = 's32[1]{0}', space=sflag, size = 0x4, scoped, tag = 'scoped memory for tpu_custom_call.1']
    #allocation7 [shape = 'u8[512]{0}', space=vmem, size = 0x400, scoped, tag = 'output window, operand 0, single buffered']
    %8 = vsyncpa [#allocation3], 0
    %9 = vsyncpa [#allocation6], 0
    %10 = vsyncpa [#allocation4], 0
    // Predicated region
    $region2: #{tpu_custom_call.1} parent=1 // pred_check
      _
    $region3: #{tpu_custom_call.1} parent=1 // pred_check_branch
      %12 = sbr.rel (0) target = $region5
    $region4: #{tpu_custom_call.1} parent=1 // pred_region
      %s14 = ssub.s32 128, 128
      %15 = vsyncadd [#allocation3], %s14
      %s17 = sshll.u32 [#allocation2], 4
      %s18 = int_to_ptr.vmem [resolvable:$true] %s17
      %20 = dma.hbm_to_vmem [thread:$0]  %s0, 128, %s18, [#allocation3]
    $region5: #{tpu_custom_call.1} parent=1 // pred_fallthru
      _
    // Predicated region
    $region6: #{tpu_custom_call.1} parent=1 // pred_check
      _
    $region7: #{tpu_custom_call.1} parent=1 // pred_check_branch
      %22 = sbr.rel (0) target = $region9
    $region8: #{tpu_custom_call.1} parent=1 // pred_region
      %s24 = ssub.s32 128, 128
      %25 = vsyncadd [#allocation6], %s24
      %s27 = sshll.u32 [#allocation5], 4
      %s28 = int_to_ptr.vmem [resolvable:$true] %s27
      %30 = dma.hbm_to_vmem [thread:$0]  %s1, 128, %s28, [#allocation6]
    $region9: #{tpu_custom_call.1} parent=1 // pred_fallthru
      _
    // Predicated region
    $region10: #{tpu_custom_call.1} parent=1 // pred_check
      _
    $region11: #{tpu_custom_call.1} parent=1 // pred_check_branch
      %32 = sbr.rel (0) target = $region13
    $region12: #{tpu_custom_call.1} parent=1 // pred_region
      _
    $region13: #{tpu_custom_call.1} parent=1 // pred_fallthru
      _
    // Predicated region
    $region14: #{tpu_custom_call.1} parent=1 // pred_check
      _
    $region15: #{tpu_custom_call.1} parent=1 // pred_check_branch
      %34 = sbr.rel (0) target = $region17
    $region16: #{tpu_custom_call.1} parent=1 // pred_region
      %35 = dma.done [#allocation3], 128
    $region17: #{tpu_custom_call.1} parent=1 // pred_fallthru
      _
    // Predicated region
    $region18: #{tpu_custom_call.1} parent=1 // pred_check
      _
    $region19: #{tpu_custom_call.1} parent=1 // pred_check_branch
      %37 = sbr.rel (0) target = $region21
    $region20: #{tpu_custom_call.1} parent=1 // pred_region
      %38 = dma.done [#allocation6], 128
    $region21: #{tpu_custom_call.1} parent=1 // pred_fallthru
      _
    %v39 = vld [vmem:[#allocation2] sm:$0xff]
    %v40 = vld [vmem:[#allocation5] sm:$0xff]
    %v41 = vld [vmem:[%s2] sm:$0x1]
    %v42 = vsub.f32 %v39, %v40
    %v43 = vmul.f32 %v42, %v42
    %v44 = vrot.slane %v43, 4
    %v45 = vadd.f32 %v43, %v44
    %v46 = vrot.slane %v45, 2
    %v47 = vadd.f32 %v45, %v46
    %v48 = vrot.slane %v47, 1
    %v49 = vadd.f32 %v47, %v48
    %v50 = vrsqrt.pop %v49
    %v51 = vmul.f32 %v49, %v50
    %vm52 = vcmp.eq.f32.partialorder %v49, inf
    %v53 = vsel %vm52, %v49, %v51
    %vm54 = vcmp.eq.f32.partialorder %v49, 0.0
    %v55 = vand.u32 %v49, 2147483648
    %v56 = vsel %vm54, %v55, %v53
    %v57 = vsub.f32 %v56, 1.0
    %v58 = vmul.f32 %v57, 1.5
    %v59 = vmax.f32 %v58, 0.0
    %v60 = vand.u32 2147483647, %v58
    %v61 = vsub.f32 0.0, %v60
    %v62 = vmul.f32 %v61, 1.442695
    %v63 = vpow.pop %v62
    %v64 = vadd.f32 %v63, 1.0
    %v65 = vlog2.pop %v64
    %v66 = vmul.f32 %v65, 0.6931472
    %v67 = vmul.f32 -0.5, %v63
    %v68 = vadd.f32 %v67, 1.0
    %v69 = vmul.f32 %v68, %v63
    %v70 = vand.u32 2147483647, %v63
    %vm71 = vcmp.lt.f32.partialorder %v70, 0.0004427343
    %v72 = vsel %vm71, %v69, %v66
    %v73 = vadd.f32 %v59, %v72
    %v74 = vsub.f32 1.0, %v41
    %v75 = vmul.f32 %v74, %v58
    %v76 = vsub.f32 %v73, %v75
    %v77 = vmul.f32 %v39, %v39
    %v78 = vrot.slane %v77, 4
    %v79 = vadd.f32 %v77, %v78
    %v80 = vrot.slane %v79, 2
    %v81 = vadd.f32 %v79, %v80
    %v82 = vrot.slane %v81, 1
    %v83 = vadd.f32 %v81, %v82
    %v84 = vmul.f32 %v40, %v40
    %v85 = vrot.slane %v84, 4
    %v86 = vadd.f32 %v84, %v85
    %v87 = vrot.slane %v86, 2
    %v88 = vadd.f32 %v86, %v87
    %v89 = vrot.slane %v88, 1
    %v90 = vadd.f32 %v88, %v89
    %v91 = vadd.f32 %v83, %v90
    %v92 = vmul.f32 %v91, 0.5
    %v93 = vadd.f32 %v92, 14.703016
    %v94 = vmul.f32 %v93, 0.032258064
    %v95 = vadd.f32 %v76, %v94
    %96 = vst [vmem:[#allocation7] sm:$0x1] %v95
    // Predicated region
    $region22: #{tpu_custom_call.1} parent=1 // pred_check
      _
    $region23: #{tpu_custom_call.1} parent=1 // pred_check_branch
      %98 = sbr.rel (0) target = $region25
    $region24: #{tpu_custom_call.1} parent=1 // pred_region
      %s100 = ssub.s32 16, 16
      %101 = vsyncadd [#allocation4], %s100
      %s103 = sshll.u32 [#allocation7], 4
      %s104 = int_to_ptr.vmem [resolvable:$true] %s103
      %106 = dma.vmem_to_hbm [thread:$0]  %s104, 16, %s3, [#allocation4]
    $region25: #{tpu_custom_call.1} parent=1 // pred_fallthru
      _
    // Predicated region
    $region26: #{tpu_custom_call.1} parent=1 // pred_check
      _
    $region27: #{tpu_custom_call.1} parent=1 // pred_check_branch
      %108 = sbr.rel (0) target = $region29
    $region28: #{tpu_custom_call.1} parent=1 // pred_region
      %109 = dma.done [#allocation4], 16
    $region29: #{tpu_custom_call.1} parent=1 // pred_fallthru
      _
    %110 = vsyncpa [#allocation3], 1
    %111 = vsyncpa [#allocation6], 1
    %112 = vsyncpa [#allocation4], 1

</llo_original>
